<compile_context>
chip_gen: v6e
topology: v6e:2x2x1
jax: 0.10.0
libtpu: 0.0.40
codegen_flags: <defaults>
</compile_context>

<pallas_src>
import functools

import jax
import jax.numpy as jnp
from jax.experimental import pallas as pl
from jax.experimental.pallas import tpu as pltpu


# ----------------------------- Pallas kernel -------------------------------

def td_vae_kernel(
    x_ref,        # (T*B, X)        time-major flattened input
    w12_ref,      # (X+P, P)        [fc1 | fc2] weights stacked on rows
    wlstm_ref,    # (P+H, 4H)       [W_ih | W_hh] stacked on rows
    bias_ref,     # (1, 2P+4H)      [b1 | b2 | b_ih+b_hh] packed on lanes
    px_ref,       # (B, T*P)        processed_x, lane-dense slab
    b_ref,        # (B, T*H)        b, lane-dense slab
    cn_ref,       # (B, H)          final cell state
    *, batch, seq_len, x_size, p_size, h_size,
):
    B, T, X, P, H = batch, seq_len, x_size, p_size, h_size

    # ---- unpack packed operands (static slices, zero runtime cost) --------
    w1 = w12_ref[0:X, :]
    w2 = w12_ref[X:X + P, :]
    wih = wlstm_ref[0:P, :]
    whh = wlstm_ref[P:P + H, :]
    b1 = bias_ref[:, 0:P]
    b2 = bias_ref[:, P:2 * P]
    blstm = bias_ref[:, 2 * P:2 * P + 4 * H]

    # ---- Hoisted PreProcess MLP over all T*B rows (batched MXU passes) ----
    x = x_ref[...]
    t1 = jax.nn.relu(jnp.dot(x, w1, preferred_element_type=jnp.float32) + b1)
    px = jax.nn.relu(jnp.dot(t1, w2, preferred_element_type=jnp.float32) + b2)

    # Lane-dense processed_x slab: column block t holds timestep t (single
    # unmasked store; assembly happens once, off the serial recurrence path).
    px_ref[...] = jnp.concatenate(
        [px[t * B:(t + 1) * B, :] for t in range(T)], axis=-1)

    # ---- Hoisted LSTM input projection (independent of h) -----------------
    gates_x = (jnp.dot(px, wih, preferred_element_type=jnp.float32)
               + blstm)                                   # (T*B, 4H)

    h = jnp.zeros((B, H), jnp.float32)
    c = jnp.zeros((B, H), jnp.float32)
    h_list = []

    # ---- Serial recurrence: statically unrolled (T is a compile-time int).
    # Per step: one contiguous sublane slice, one (B,H)x(H,4H) MXU matmul,
    # 3 EUP pushes, and elementwise gate math.  No per-step stores.
    # Gate order matches PyTorch nn.LSTM: i, f, g, o.
    for t in range(T):
        gx_t = gates_x[t * B:(t + 1) * B, :]              # contiguous slice
        gates = gx_t + jnp.dot(h, whh, preferred_element_type=jnp.float32)

        act = jax.nn.sigmoid(gates)                       # one 4H-lane EUP push
        i_g = act[:, 0 * H:1 * H]
        f_g = act[:, 1 * H:2 * H]
        o_g = act[:, 3 * H:4 * H]
        g_g = jnp.tanh(gates[:, 2 * H:3 * H])

        c = f_g * c + i_g * g_g
        h = o_g * jnp.tanh(c)
        h_list.append(h)

    # Single lane-dense writeback of the whole b slab after the loop.
    b_ref[...] = jnp.concatenate(h_list, axis=-1)         # (B, T*H)
    cn_ref[...] = c


# ------------------------------ Host wrapper -------------------------------

@jax.jit
def td_vae_forward(images, params):
    """images: (B, T, x_size) float32, batch-first like the PyTorch module."""
    B, T, X = images.shape
    P = params["w1"].shape[1]
    H = params["whh"].shape[0]

    # Time-major flattened input (tiny one-time XLA transpose).
    x_tm = jnp.transpose(images, (1, 0, 2)).reshape(T * B, X)

    # Pack 8 parameter operands into 3 (fewer startup DMAs for a gridless call).
    w12 = jnp.concatenate([params["w1"], params["w2"]], axis=0)        # (X+P, P)
    wlstm = jnp.concatenate([params["wih"], params["whh"]], axis=0)    # (P+H, 4H)
    biases = jnp.concatenate(
        [params["b1"], params["b2"], params["bih"] + params["bhh"]], axis=-1)

    vmem = pl.BlockSpec(memory_space=pltpu.MemorySpace.VMEM)

    px_slab, b_slab, cn = pl.pallas_call(
        functools.partial(td_vae_kernel, batch=B, seq_len=T,
                          x_size=X, p_size=P, h_size=H),
        out_shape=(
            jax.ShapeDtypeStruct((B, T * P), jnp.float32),
            jax.ShapeDtypeStruct((B, T * H), jnp.float32),
            jax.ShapeDtypeStruct((B, H), jnp.float32),
        ),
        in_specs=[vmem] * 4,
        out_specs=(vmem, vmem, vmem),
    )(x_tm, w12, wlstm, biases)

    processed_x = px_slab.reshape(B, T, P)               # free reshape
    b = b_slab.reshape(B, T, H)                          # free reshape
    h_n = b[:, -1, :][None]                              # (1, B, H) like nn.LSTM
    c_n = cn[None]                                       # (1, B, H)
    return processed_x, b, (h_n, c_n)


# --------------------------- Pure-JAX reference -----------------------------

def td_vae_forward_ref(images, params):
    hi = jax.lax.Precision.HIGHEST
    t1 = jax.nn.relu(jnp.matmul(images, params["w1"], precision=hi) + params["b1"][0])
    px = jax.nn.relu(jnp.matmul(t1, params["w2"], precision=hi) + params["b2"][0])
    B = images.shape[0]
    H = params["whh"].shape[0]

    def step(carry, x_t):
        h, c = carry
        gates = (jnp.matmul(x_t, params["wih"], precision=hi) + params["bih"][0]
                 + jnp.matmul(h, params["whh"], precision=hi) + params["bhh"][0])
        i_g = jax.nn.sigmoid(gates[:, 0 * H:1 * H])
        f_g = jax.nn.sigmoid(gates[:, 1 * H:2 * H])
        g_g = jnp.tanh(gates[:, 2 * H:3 * H])
        o_g = jax.nn.sigmoid(gates[:, 3 * H:4 * H])
        c_new = f_g * c + i_g * g_g
        h_new = o_g * jnp.tanh(c_new)
        return (h_new, c_new), h_new

    h0 = jnp.zeros((B, H), jnp.float32)
    c0 = jnp.zeros((B, H), jnp.float32)
    (hn, cn), b_tm = jax.lax.scan(step, (h0, c0), jnp.transpose(px, (1, 0, 2)))
    return px, jnp.transpose(b_tm, (1, 0, 2)), (hn[None], cn[None])


# --------------------------------- Driver -----------------------------------

def init_params(key, x_size, processed_x_size, b_size):
    ks = jax.random.split(key, 8)
    s = 0.1
    P, H = processed_x_size, b_size
    return {
        "w1":  s * jax.random.normal(ks[0], (x_size, P), jnp.float32),
        "b1":  s * jax.random.normal(ks[1], (1, P), jnp.float32),
        "w2":  s * jax.random.normal(ks[2], (P, P), jnp.float32),
        "b2":  s * jax.random.normal(ks[3], (1, P), jnp.float32),
        "wih": s * jax.random.normal(ks[4], (P, 4 * H), jnp.float32),
        "bih": s * jax.random.normal(ks[5], (1, 4 * H), jnp.float32),
        "whh": s * jax.random.normal(ks[6], (H, 4 * H), jnp.float32),
        "bhh": s * jax.random.normal(ks[7], (1, 4 * H), jnp.float32),
    }


if __name__ == "__main__":
    # Small TD_VAE config: x_size=16, processed_x_size=16, b_size=32
    B, T, X, P, H = 2, 8, 16, 16, 32

    key = jax.random.PRNGKey(0)
    kx, kp = jax.random.split(key)
    # inputs are "images" flattened to (B, T, x_size), in [0, 1] like MNIST
    images = jax.random.uniform(kx, (B, T, X), jnp.float32)
    params = init_params(kp, X, P, H)

    processed_x, b, (h_n, c_n) = td_vae_forward(images, params)
    jax.block_until_ready((processed_x, b, h_n, c_n))

    # sanity check against pure-JAX reference
    px_r, b_r, (hn_r, cn_r) = td_vae_forward_ref(images, params)
    assert processed_x.shape == (B, T, P)
    assert b.shape == (B, T, H)
    assert h_n.shape == (1, B, H) and c_n.shape == (1, B, H)
    assert jnp.allclose(processed_x, px_r, atol=1e-4, rtol=1e-4)
    assert jnp.allclose(b, b_r, atol=1e-4, rtol=1e-4)
    assert jnp.allclose(h_n, hn_r, atol=1e-4, rtol=1e-4)
    assert jnp.allclose(c_n, cn_r, atol=1e-4, rtol=1e-4)

    print("KERNEL_OK")
</pallas_src>

<mosaic_0001>
module attributes {stable_mosaic.version = 11 : i64} {
  func.func @td_vae_kernel(%arg0: memref<16x16xf32, #tpu.memory_space<vmem>>, %arg1: memref<32x16xf32, #tpu.memory_space<vmem>>, %arg2: memref<48x128xf32, #tpu.memory_space<vmem>>, %arg3: memref<1x160xf32, #tpu.memory_space<vmem>>, %arg4: memref<2x128xf32, #tpu.memory_space<vmem>>, %arg5: memref<2x256xf32, #tpu.memory_space<vmem>>, %arg6: memref<2x32xf32, #tpu.memory_space<vmem>>) attributes {dimension_semantics = [], scalar_prefetch = 0 : i64, scratch_operands = 0 : i64, tpu.core_type = #tpu.core_type<tc>} {
    %c0 = arith.constant 0 : index
    %c0_0 = arith.constant 0 : index
    %0 = vector.load %arg1[%c0, %c0_0] : memref<32x16xf32, #tpu.memory_space<vmem>>, vector<16x16xf32>
    %c16 = arith.constant 16 : index
    %c0_1 = arith.constant 0 : index
    %1 = vector.load %arg1[%c16, %c0_1] : memref<32x16xf32, #tpu.memory_space<vmem>>, vector<16x16xf32>
    %c0_2 = arith.constant 0 : index
    %c0_3 = arith.constant 0 : index
    %2 = vector.load %arg2[%c0_2, %c0_3] : memref<48x128xf32, #tpu.memory_space<vmem>>, vector<16x128xf32>
    %c16_4 = arith.constant 16 : index
    %c0_5 = arith.constant 0 : index
    %3 = vector.load %arg2[%c16_4, %c0_5] : memref<48x128xf32, #tpu.memory_space<vmem>>, vector<32x128xf32>
    %c0_6 = arith.constant 0 : index
    %c0_7 = arith.constant 0 : index
    %4 = vector.load %arg3[%c0_6, %c0_7] : memref<1x160xf32, #tpu.memory_space<vmem>>, vector<1x16xf32>
    %c0_8 = arith.constant 0 : index
    %c16_9 = arith.constant 16 : index
    %5 = vector.load %arg3[%c0_8, %c16_9] : memref<1x160xf32, #tpu.memory_space<vmem>>, vector<1x16xf32>
    %c0_10 = arith.constant 0 : index
    %c32 = arith.constant 32 : index
    %6 = vector.load %arg3[%c0_10, %c32] : memref<1x160xf32, #tpu.memory_space<vmem>>, vector<1x128xf32>
    %c0_11 = arith.constant 0 : index
    %c0_12 = arith.constant 0 : index
    %7 = vector.load %arg0[%c0_11, %c0_12] : memref<16x16xf32, #tpu.memory_space<vmem>>, vector<16x16xf32>
    %cst = arith.constant dense<0.000000e+00> : vector<16x16xf32>
    %8 = tpu.matmul %7, %0, %cst {dimension_numbers = #tpu.dot_dimension_numbers<[1], [0], [0], [1], [0, 0, 1, 1], [], []>} : vector<16x16xf32>, vector<16x16xf32>, vector<16x16xf32> -> vector<16x16xf32>
    %9 = vector.broadcast %4 : vector<1x16xf32> to vector<16x16xf32>
    %10 = arith.addf %8, %9 : vector<16x16xf32>
    %cst_13 = arith.constant 0.000000e+00 : f32
    %11 = vector.broadcast %cst_13 : f32 to vector<16x16xf32>
    %12 = arith.maximumf %10, %11 : vector<16x16xf32>
    %cst_14 = arith.constant dense<0.000000e+00> : vector<16x16xf32>
    %13 = tpu.matmul %12, %1, %cst_14 {dimension_numbers = #tpu.dot_dimension_numbers<[1], [0], [0], [1], [0, 0, 1, 1], [], []>} : vector<16x16xf32>, vector<16x16xf32>, vector<16x16xf32> -> vector<16x16xf32>
    %14 = vector.broadcast %5 : vector<1x16xf32> to vector<16x16xf32>
    %15 = arith.addf %13, %14 : vector<16x16xf32>
    %cst_15 = arith.constant 0.000000e+00 : f32
    %16 = vector.broadcast %cst_15 : f32 to vector<16x16xf32>
    %17 = arith.maximumf %15, %16 : vector<16x16xf32>
    %18 = vector.extract_strided_slice %17 {offsets = [0, 0], sizes = [2, 16], strides = [1, 1]} : vector<16x16xf32> to vector<2x16xf32>
    %19 = vector.extract_strided_slice %17 {offsets = [2, 0], sizes = [2, 16], strides = [1, 1]} : vector<16x16xf32> to vector<2x16xf32>
    %20 = vector.extract_strided_slice %17 {offsets = [4, 0], sizes = [2, 16], strides = [1, 1]} : vector<16x16xf32> to vector<2x16xf32>
    %21 = vector.extract_strided_slice %17 {offsets = [6, 0], sizes = [2, 16], strides = [1, 1]} : vector<16x16xf32> to vector<2x16xf32>
    %22 = vector.extract_strided_slice %17 {offsets = [8, 0], sizes = [2, 16], strides = [1, 1]} : vector<16x16xf32> to vector<2x16xf32>
    %23 = vector.extract_strided_slice %17 {offsets = [10, 0], sizes = [2, 16], strides = [1, 1]} : vector<16x16xf32> to vector<2x16xf32>
    %24 = vector.extract_strided_slice %17 {offsets = [12, 0], sizes = [2, 16], strides = [1, 1]} : vector<16x16xf32> to vector<2x16xf32>
    %25 = vector.extract_strided_slice %17 {offsets = [14, 0], sizes = [2, 16], strides = [1, 1]} : vector<16x16xf32> to vector<2x16xf32>
    %26 = tpu.concatenate %18, %19, %20, %21, %22, %23, %24, %25 in 1 : vector<2x16xf32>, vector<2x16xf32>, vector<2x16xf32>, vector<2x16xf32>, vector<2x16xf32>, vector<2x16xf32>, vector<2x16xf32>, vector<2x16xf32> -> vector<2x128xf32>
    %c0_16 = arith.constant 0 : index
    %c0_17 = arith.constant 0 : index
    %27 = vector.load %arg4[%c0_16, %c0_17] : memref<2x128xf32, #tpu.memory_space<vmem>>, vector<2x128xf32>
    tpu.vector_store %arg4[%c0_16, %c0_17], %26 {strides = array<i32>} : memref<2x128xf32, #tpu.memory_space<vmem>>, vector<2x128xf32>,
    %cst_18 = arith.constant dense<0.000000e+00> : vector<16x128xf32>
    %28 = tpu.matmul %17, %2, %cst_18 {dimension_numbers = #tpu.dot_dimension_numbers<[1], [0], [0], [1], [0, 0, 1, 1], [], []>} : vector<16x16xf32>, vector<16x128xf32>, vector<16x128xf32> -> vector<16x128xf32>
    %29 = vector.broadcast %6 : vector<1x128xf32> to vector<16x128xf32>
    %30 = arith.addf %28, %29 : vector<16x128xf32>
    %cst_19 = arith.constant 0.000000e+00 : f32
    %31 = vector.broadcast %cst_19 : f32 to vector<2x32xf32>
    %cst_20 = arith.constant 0.000000e+00 : f32
    %32 = vector.broadcast %cst_20 : f32 to vector<2x32xf32>
    %33 = vector.extract_strided_slice %30 {offsets = [0, 0], sizes = [2, 128], strides = [1, 1]} : vector<16x128xf32> to vector<2x128xf32>
    %cst_21 = arith.constant dense<0.000000e+00> : vector<2x128xf32>
    %34 = tpu.matmul %31, %3, %cst_21 {dimension_numbers = #tpu.dot_dimension_numbers<[1], [0], [0], [1], [0, 0, 1, 1], [], []>} : vector<2x32xf32>, vector<32x128xf32>, vector<2x128xf32> -> vector<2x128xf32>
    %35 = arith.addf %33, %34 : vector<2x128xf32>
    %36 = arith.negf %35 : vector<2x128xf32>
    %37 = math.exp %36 : vector<2x128xf32>
    %cst_22 = arith.constant 1.000000e+00 : f32
    %38 = vector.broadcast %cst_22 : f32 to vector<2x128xf32>
    %39 = arith.addf %38, %37 : vector<2x128xf32>
    %40 = arith.divf %38, %39 : vector<2x128xf32>
    %41 = vector.extract_strided_slice %40 {offsets = [0, 0], sizes = [2, 32], strides = [1, 1]} : vector<2x128xf32> to vector<2x32xf32>
    %42 = vector.extract_strided_slice %40 {offsets = [0, 32], sizes = [2, 32], strides = [1, 1]} : vector<2x128xf32> to vector<2x32xf32>
    %43 = vector.extract_strided_slice %40 {offsets = [0, 96], sizes = [2, 32], strides = [1, 1]} : vector<2x128xf32> to vector<2x32xf32>
    %44 = vector.extract_strided_slice %35 {offsets = [0, 64], sizes = [2, 32], strides = [1, 1]} : vector<2x128xf32> to vector<2x32xf32>
    %45 = math.tanh %44 : vector<2x32xf32>
    %46 = arith.mulf %42, %32 : vector<2x32xf32>
    %47 = arith.mulf %41, %45 : vector<2x32xf32>
    %48 = arith.addf %46, %47 : vector<2x32xf32>
    %49 = math.tanh %48 : vector<2x32xf32>
    %50 = arith.mulf %43, %49 : vector<2x32xf32>
    %51 = vector.extract_strided_slice %30 {offsets = [2, 0], sizes = [2, 128], strides = [1, 1]} : vector<16x128xf32> to vector<2x128xf32>
    %cst_23 = arith.constant dense<0.000000e+00> : vector<2x128xf32>
    %52 = tpu.matmul %50, %3, %cst_23 {dimension_numbers = #tpu.dot_dimension_numbers<[1], [0], [0], [1], [0, 0, 1, 1], [], []>} : vector<2x32xf32>, vector<32x128xf32>, vector<2x128xf32> -> vector<2x128xf32>
    %53 = arith.addf %51, %52 : vector<2x128xf32>
    %54 = arith.negf %53 : vector<2x128xf32>
    %55 = math.exp %54 : vector<2x128xf32>
    %cst_24 = arith.constant 1.000000e+00 : f32
    %56 = vector.broadcast %cst_24 : f32 to vector<2x128xf32>
    %57 = arith.addf %56, %55 : vector<2x128xf32>
    %58 = arith.divf %56, %57 : vector<2x128xf32>
    %59 = vector.extract_strided_slice %58 {offsets = [0, 0], sizes = [2, 32], strides = [1, 1]} : vector<2x128xf32> to vector<2x32xf32>
    %60 = vector.extract_strided_slice %58 {offsets = [0, 32], sizes = [2, 32], strides = [1, 1]} : vector<2x128xf32> to vector<2x32xf32>
    %61 = vector.extract_strided_slice %58 {offsets = [0, 96], sizes = [2, 32], strides = [1, 1]} : vector<2x128xf32> to vector<2x32xf32>
    %62 = vector.extract_strided_slice %53 {offsets = [0, 64], sizes = [2, 32], strides = [1, 1]} : vector<2x128xf32> to vector<2x32xf32>
    %63 = math.tanh %62 : vector<2x32xf32>
    %64 = arith.mulf %60, %48 : vector<2x32xf32>
    %65 = arith.mulf %59, %63 : vector<2x32xf32>
    %66 = arith.addf %64, %65 : vector<2x32xf32>
    %67 = math.tanh %66 : vector<2x32xf32>
    %68 = arith.mulf %61, %67 : vector<2x32xf32>
    %69 = vector.extract_strided_slice %30 {offsets = [4, 0], sizes = [2, 128], strides = [1, 1]} : vector<16x128xf32> to vector<2x128xf32>
    %cst_25 = arith.constant dense<0.000000e+00> : vector<2x128xf32>
    %70 = tpu.matmul %68, %3, %cst_25 {dimension_numbers = #tpu.dot_dimension_numbers<[1], [0], [0], [1], [0, 0, 1, 1], [], []>} : vector<2x32xf32>, vector<32x128xf32>, vector<2x128xf32> -> vector<2x128xf32>
    %71 = arith.addf %69, %70 : vector<2x128xf32>
    %72 = arith.negf %71 : vector<2x128xf32>
    %73 = math.exp %72 : vector<2x128xf32>
    %cst_26 = arith.constant 1.000000e+00 : f32
    %74 = vector.broadcast %cst_26 : f32 to vector<2x128xf32>
    %75 = arith.addf %74, %73 : vector<2x128xf32>
    %76 = arith.divf %74, %75 : vector<2x128xf32>
    %77 = vector.extract_strided_slice %76 {offsets = [0, 0], sizes = [2, 32], strides = [1, 1]} : vector<2x128xf32> to vector<2x32xf32>
    %78 = vector.extract_strided_slice %76 {offsets = [0, 32], sizes = [2, 32], strides = [1, 1]} : vector<2x128xf32> to vector<2x32xf32>
    %79 = vector.extract_strided_slice %76 {offsets = [0, 96], sizes = [2, 32], strides = [1, 1]} : vector<2x128xf32> to vector<2x32xf32>
    %80 = vector.extract_strided_slice %71 {offsets = [0, 64], sizes = [2, 32], strides = [1, 1]} : vector<2x128xf32> to vector<2x32xf32>
    %81 = math.tanh %80 : vector<2x32xf32>
    %82 = arith.mulf %78, %66 : vector<2x32xf32>
    %83 = arith.mulf %77, %81 : vector<2x32xf32>
    %84 = arith.addf %82, %83 : vector<2x32xf32>
    %85 = math.tanh %84 : vector<2x32xf32>
    %86 = arith.mulf %79, %85 : vector<2x32xf32>
    %87 = vector.extract_strided_slice %30 {offsets = [6, 0], sizes = [2, 128], strides = [1, 1]} : vector<16x128xf32> to vector<2x128xf32>
    %cst_27 = arith.constant dense<0.000000e+00> : vector<2x128xf32>
    %88 = tpu.matmul %86, %3, %cst_27 {dimension_numbers = #tpu.dot_dimension_numbers<[1], [0], [0], [1], [0, 0, 1, 1], [], []>} : vector<2x32xf32>, vector<32x128xf32>, vector<2x128xf32> -> vector<2x128xf32>
    %89 = arith.addf %87, %88 : vector<2x128xf32>
    %90 = arith.negf %89 : vector<2x128xf32>
    %91 = math.exp %90 : vector<2x128xf32>
    %cst_28 = arith.constant 1.000000e+00 : f32
    %92 = vector.broadcast %cst_28 : f32 to vector<2x128xf32>
    %93 = arith.addf %92, %91 : vector<2x128xf32>
    %94 = arith.divf %92, %93 : vector<2x128xf32>
    %95 = vector.extract_strided_slice %94 {offsets = [0, 0], sizes = [2, 32], strides = [1, 1]} : vector<2x128xf32> to vector<2x32xf32>
    %96 = vector.extract_strided_slice %94 {offsets = [0, 32], sizes = [2, 32], strides = [1, 1]} : vector<2x128xf32> to vector<2x32xf32>
    %97 = vector.extract_strided_slice %94 {offsets = [0, 96], sizes = [2, 32], strides = [1, 1]} : vector<2x128xf32> to vector<2x32xf32>
    %98 = vector.extract_strided_slice %89 {offsets = [0, 64], sizes = [2, 32], strides = [1, 1]} : vector<2x128xf32> to vector<2x32xf32>
    %99 = math.tanh %98 : vector<2x32xf32>
    %100 = arith.mulf %96, %84 : vector<2x32xf32>
    %101 = arith.mulf %95, %99 : vector<2x32xf32>
    %102 = arith.addf %100, %101 : vector<2x32xf32>
    %103 = math.tanh %102 : vector<2x32xf32>
    %104 = arith.mulf %97, %103 : vector<2x32xf32>
    %105 = vector.extract_strided_slice %30 {offsets = [8, 0], sizes = [2, 128], strides = [1, 1]} : vector<16x128xf32> to vector<2x128xf32>
    %cst_29 = arith.constant dense<0.000000e+00> : vector<2x128xf32>
    %106 = tpu.matmul %104, %3, %cst_29 {dimension_numbers = #tpu.dot_dimension_numbers<[1], [0], [0], [1], [0, 0, 1, 1], [], []>} : vector<2x32xf32>, vector<32x128xf32>, vector<2x128xf32> -> vector<2x128xf32>
    %107 = arith.addf %105, %106 : vector<2x128xf32>
    %108 = arith.negf %107 : vector<2x128xf32>
    %109 = math.exp %108 : vector<2x128xf32>
    %cst_30 = arith.constant 1.000000e+00 : f32
    %110 = vector.broadcast %cst_30 : f32 to vector<2x128xf32>
    %111 = arith.addf %110, %109 : vector<2x128xf32>
    %112 = arith.divf %110, %111 : vector<2x128xf32>
    %113 = vector.extract_strided_slice %112 {offsets = [0, 0], sizes = [2, 32], strides = [1, 1]} : vector<2x128xf32> to vector<2x32xf32>
    %114 = vector.extract_strided_slice %112 {offsets = [0, 32], sizes = [2, 32], strides = [1, 1]} : vector<2x128xf32> to vector<2x32xf32>
    %115 = vector.extract_strided_slice %112 {offsets = [0, 96], sizes = [2, 32], strides = [1, 1]} : vector<2x128xf32> to vector<2x32xf32>
    %116 = vector.extract_strided_slice %107 {offsets = [0, 64], sizes = [2, 32], strides = [1, 1]} : vector<2x128xf32> to vector<2x32xf32>
    %117 = math.tanh %116 : vector<2x32xf32>
    %118 = arith.mulf %114, %102 : vector<2x32xf32>
    %119 = arith.mulf %113, %117 : vector<2x32xf32>
    %120 = arith.addf %118, %119 : vector<2x32xf32>
    %121 = math.tanh %120 : vector<2x32xf32>
    %122 = arith.mulf %115, %121 : vector<2x32xf32>
    %123 = vector.extract_strided_slice %30 {offsets = [10, 0], sizes = [2, 128], strides = [1, 1]} : vector<16x128xf32> to vector<2x128xf32>
    %cst_31 = arith.constant dense<0.000000e+00> : vector<2x128xf32>
    %124 = tpu.matmul %122, %3, %cst_31 {dimension_numbers = #tpu.dot_dimension_numbers<[1], [0], [0], [1], [0, 0, 1, 1], [], []>} : vector<2x32xf32>, vector<32x128xf32>, vector<2x128xf32> -> vector<2x128xf32>
    %125 = arith.addf %123, %124 : vector<2x128xf32>
    %126 = arith.negf %125 : vector<2x128xf32>
    %127 = math.exp %126 : vector<2x128xf32>
    %cst_32 = arith.constant 1.000000e+00 : f32
    %128 = vector.broadcast %cst_32 : f32 to vector<2x128xf32>
    %129 = arith.addf %128, %127 : vector<2x128xf32>
    %130 = arith.divf %128, %129 : vector<2x128xf32>
    %131 = vector.extract_strided_slice %130 {offsets = [0, 0], sizes = [2, 32], strides = [1, 1]} : vector<2x128xf32> to vector<2x32xf32>
    %132 = vector.extract_strided_slice %130 {offsets = [0, 32], sizes = [2, 32], strides = [1, 1]} : vector<2x128xf32> to vector<2x32xf32>
    %133 = vector.extract_strided_slice %130 {offsets = [0, 96], sizes = [2, 32], strides = [1, 1]} : vector<2x128xf32> to vector<2x32xf32>
    %134 = vector.extract_strided_slice %125 {offsets = [0, 64], sizes = [2, 32], strides = [1, 1]} : vector<2x128xf32> to vector<2x32xf32>
    %135 = math.tanh %134 : vector<2x32xf32>
    %136 = arith.mulf %132, %120 : vector<2x32xf32>
    %137 = arith.mulf %131, %135 : vector<2x32xf32>
    %138 = arith.addf %136, %137 : vector<2x32xf32>
    %139 = math.tanh %138 : vector<2x32xf32>
    %140 = arith.mulf %133, %139 : vector<2x32xf32>
    %141 = vector.extract_strided_slice %30 {offsets = [12, 0], sizes = [2, 128], strides = [1, 1]} : vector<16x128xf32> to vector<2x128xf32>
    %cst_33 = arith.constant dense<0.000000e+00> : vector<2x128xf32>
    %142 = tpu.matmul %140, %3, %cst_33 {dimension_numbers = #tpu.dot_dimension_numbers<[1], [0], [0], [1], [0, 0, 1, 1], [], []>} : vector<2x32xf32>, vector<32x128xf32>, vector<2x128xf32> -> vector<2x128xf32>
    %143 = arith.addf %141, %142 : vector<2x128xf32>
    %144 = arith.negf %143 : vector<2x128xf32>
    %145 = math.exp %144 : vector<2x128xf32>
    %cst_34 = arith.constant 1.000000e+00 : f32
    %146 = vector.broadcast %cst_34 : f32 to vector<2x128xf32>
    %147 = arith.addf %146, %145 : vector<2x128xf32>
    %148 = arith.divf %146, %147 : vector<2x128xf32>
    %149 = vector.extract_strided_slice %148 {offsets = [0, 0], sizes = [2, 32], strides = [1, 1]} : vector<2x128xf32> to vector<2x32xf32>
    %150 = vector.extract_strided_slice %148 {offsets = [0, 32], sizes = [2, 32], strides = [1, 1]} : vector<2x128xf32> to vector<2x32xf32>
    %151 = vector.extract_strided_slice %148 {offsets = [0, 96], sizes = [2, 32], strides = [1, 1]} : vector<2x128xf32> to vector<2x32xf32>
    %152 = vector.extract_strided_slice %143 {offsets = [0, 64], sizes = [2, 32], strides = [1, 1]} : vector<2x128xf32> to vector<2x32xf32>
    %153 = math.tanh %152 : vector<2x32xf32>
    %154 = arith.mulf %150, %138 : vector<2x32xf32>
    %155 = arith.mulf %149, %153 : vector<2x32xf32>
    %156 = arith.addf %154, %155 : vector<2x32xf32>
    %157 = math.tanh %156 : vector<2x32xf32>
    %158 = arith.mulf %151, %157 : vector<2x32xf32>
    %159 = vector.extract_strided_slice %30 {offsets = [14, 0], sizes = [2, 128], strides = [1, 1]} : vector<16x128xf32> to vector<2x128xf32>
    %cst_35 = arith.constant dense<0.000000e+00> : vector<2x128xf32>
    %160 = tpu.matmul %158, %3, %cst_35 {dimension_numbers = #tpu.dot_dimension_numbers<[1], [0], [0], [1], [0, 0, 1, 1], [], []>} : vector<2x32xf32>, vector<32x128xf32>, vector<2x128xf32> -> vector<2x128xf32>
    %161 = arith.addf %159, %160 : vector<2x128xf32>
    %162 = arith.negf %161 : vector<2x128xf32>
    %163 = math.exp %162 : vector<2x128xf32>
    %cst_36 = arith.constant 1.000000e+00 : f32
    %164 = vector.broadcast %cst_36 : f32 to vector<2x128xf32>
    %165 = arith.addf %164, %163 : vector<2x128xf32>
    %166 = arith.divf %164, %165 : vector<2x128xf32>
    %167 = vector.extract_strided_slice %166 {offsets = [0, 0], sizes = [2, 32], strides = [1, 1]} : vector<2x128xf32> to vector<2x32xf32>
    %168 = vector.extract_strided_slice %166 {offsets = [0, 32], sizes = [2, 32], strides = [1, 1]} : vector<2x128xf32> to vector<2x32xf32>
    %169 = vector.extract_strided_slice %166 {offsets = [0, 96], sizes = [2, 32], strides = [1, 1]} : vector<2x128xf32> to vector<2x32xf32>
    %170 = vector.extract_strided_slice %161 {offsets = [0, 64], sizes = [2, 32], strides = [1, 1]} : vector<2x128xf32> to vector<2x32xf32>
    %171 = math.tanh %170 : vector<2x32xf32>
    %172 = arith.mulf %168, %156 : vector<2x32xf32>
    %173 = arith.mulf %167, %171 : vector<2x32xf32>
    %174 = arith.addf %172, %173 : vector<2x32xf32>
    %175 = math.tanh %174 : vector<2x32xf32>
    %176 = arith.mulf %169, %175 : vector<2x32xf32>
    %177 = tpu.concatenate %50, %68, %86, %104, %122, %140, %158, %176 in 1 : vector<2x32xf32>, vector<2x32xf32>, vector<2x32xf32>, vector<2x32xf32>, vector<2x32xf32>, vector<2x32xf32>, vector<2x32xf32>, vector<2x32xf32> -> vector<2x256xf32>
    %c0_37 = arith.constant 0 : index
    %c0_38 = arith.constant 0 : index
    %178 = vector.load %arg5[%c0_37, %c0_38] : memref<2x256xf32, #tpu.memory_space<vmem>>, vector<2x256xf32>
    tpu.vector_store %arg5[%c0_37, %c0_38], %177 {strides = array<i32>} : memref<2x256xf32, #tpu.memory_space<vmem>>, vector<2x256xf32>,
    %c0_39 = arith.constant 0 : index
    %c0_40 = arith.constant 0 : index
    %179 = vector.load %arg6[%c0_39, %c0_40] : memref<2x32xf32, #tpu.memory_space<vmem>>, vector<2x32xf32>
    tpu.vector_store %arg6[%c0_39, %c0_40], %174 {strides = array<i32>} : memref<2x32xf32, #tpu.memory_space<vmem>>, vector<2x32xf32>,
    return
  }
}

</mosaic_0001>

<llo_original>
// kernel: td_vae_forward.1
$region0: #{td_vae_forward.1}
  #allocation0 [shape = 'u32[]', space=smem, size = 0x4, offset = 0x4, fixed_abs, tag = 'smem constant byte address 0x4 - core index']
  #allocation1 [shape = 'u32[144,128]{1,0:T(1,128)}', space=vmem, size = 0x12000, scoped, tag = 'internal scratch']
  %s0 = inlined_call_operand.vmem [shape: f32[16,16], index: 0, kind: input, shape index: {}]
  %s1 = inlined_call_operand.vmem [shape: f32[32,16], index: 1, kind: input, shape index: {}]
  %s2 = inlined_call_operand.vmem [shape: f32[48,128], index: 2, kind: input, shape index: {}]
  %s3 = inlined_call_operand.vmem [shape: f32[1,160], index: 3, kind: input, shape index: {}]
  %s4 = inlined_call_operand.vmem [shape: f32[2,128], index: 4, kind: output, shape index: {0}]
  %s5 = inlined_call_operand.vmem [shape: f32[2,256], index: 5, kind: output, shape index: {1}]
  %s6 = inlined_call_operand.hbm [shape: f32[2,32], index: 6, kind: output, shape index: {2}]
  %7 = xla_tuple %s4, %s5, %s6
  %s8 = sld [smem:[#allocation0]]
  $region42: #{td_vae_forward.1} parent=0
    _
  %s10 = ssub.s32 1, %s8
  %s11 = scalar_select 0, %s10, %s8
  $region1: #{td_vae_forward.1} parent=0
    #allocation2 [shape = 'u8[1024]{0}', space=vmem, size = 0x400, scoped, tag = 'output window, operand 2, single buffered']
    #allocation3 [shape = 's32[1]{0}', space=sflag, size = 0x4, scoped, tag = 'scoped memory for td_vae_forward.1']
    %12 = vsyncpa [#allocation3], 0
    // Predicated region
    $region2: #{td_vae_forward.1} parent=1 // pred_check
      _
    $region3: #{td_vae_forward.1} parent=1 // pred_check_branch
      %14 = sbr.rel (0) target = $region5
    $region4: #{td_vae_forward.1} parent=1 // pred_region
      _
    $region5: #{td_vae_forward.1} parent=1 // pred_fallthru
      _
    // Predicated region
    $region6: #{td_vae_forward.1} parent=1 // pred_check
      _
    $region7: #{td_vae_forward.1} parent=1 // pred_check_branch
      %16 = sbr.rel (0) target = $region9
    $region8: #{td_vae_forward.1} parent=1 // pred_region
      _
    $region9: #{td_vae_forward.1} parent=1 // pred_fallthru
      _
    // Predicated region
    $region10: #{td_vae_forward.1} parent=1 // pred_check
      _
    $region11: #{td_vae_forward.1} parent=1 // pred_check_branch
      %18 = sbr.rel (0) target = $region13
    $region12: #{td_vae_forward.1} parent=1 // pred_region
      _
    $region13: #{td_vae_forward.1} parent=1 // pred_fallthru
      _
    // Predicated region
    $region14: #{td_vae_forward.1} parent=1 // pred_check
      _
    $region15: #{td_vae_forward.1} parent=1 // pred_check_branch
      %20 = sbr.rel (0) target = $region17
    $region16: #{td_vae_forward.1} parent=1 // pred_region
      _
    $region17: #{td_vae_forward.1} parent=1 // pred_fallthru
      _
    %v21 = vld [vmem:[%s1] sm:$0xff]
    %v22 = vld [vmem:[%s1 + $0x8] sm:$0xff]
    %v23 = vld [vmem:[%s1 + $0x10] sm:$0xff]
    %v24 = vld [vmem:[%s1 + $0x18] sm:$0xff]
    %v25 = vld [vmem:[%s2] sm:$0xff]
    %v26 = vld [vmem:[%s2 + $0x8] sm:$0xff]
    %v27 = vld [vmem:[%s2 + $0x10] sm:$0xff]
    %v28 = vld [vmem:[%s2 + $0x18] sm:$0xff]
    %v29 = vld [vmem:[%s2 + $0x20] sm:$0xff]
    %v30 = vld [vmem:[%s2 + $0x28] sm:$0xff]
    %v31 = vld [vmem:[%s3] sm:$0x1]
    %v32 = vld [vmem:[%s3] sm:$0x3]
    %v33 = vld [vmem:[%s0] sm:$0xff]
    %v34 = vld [vmem:[%s0 + $0x8] sm:$0xff]
    %v36 = vlaneseq
    %v37 = vshrl.u32 %v36, 7
    %v38 = vsub.s32 0, %v37
    %v39 = vrot.slane %v31, %v38
    %vm41 = vcmask 130048
    %v43 = vsel %vm41, %v33, 0
    %v46 = vsel %vm41, %v34, 0
    %48 = vmatprep.subr.mxu0 0.0
    %49 = vmatpush1.msra.mxu0 0.0
    %50 = vmatprep.subr.mxu0 0.0
    %51 = vmatpush1.msra.mxu0 0.0
    %52 = vmatprep.subr.mxu0 0.0
    %53 = vmatpush1.msra.mxu0 0.0
    %54 = vmatprep.subr.mxu0 0.0
    %55 = vmatpush1.msra.mxu0 0.0
    %56 = vmatprep.subr.mxu0 0.0
    %57 = vmatpush1.msra.mxu0 0.0
    %58 = vmatprep.subr.mxu0 0.0
    %59 = vmatpush1.msra.mxu0 0.0
    %60 = vmatprep.subr.mxu0 0.0
    %61 = vmatpush1.msra.mxu0 0.0
    %62 = vmatprep.subr.mxu0 0.0
    %63 = vmatpush1.msra.mxu0 0.0
    %64 = vmatprep.subr.mxu0 0.0
    %65 = vmatpush1.msra.mxu0 0.0
    %66 = vmatprep.subr.mxu0 0.0
    %67 = vmatpush1.msra.mxu0 0.0
    %68 = vmatprep.subr.mxu0 0.0
    %69 = vmatpush1.msra.mxu0 0.0
    %70 = vmatprep.subr.mxu0 0.0
    %71 = vmatpush1.msra.mxu0 0.0
    %72 = vmatprep.subr.mxu0 0.0
    %73 = vmatpush1.msra.mxu0 0.0
    %74 = vmatprep.subr.mxu0 0.0
    %75 = vmatpush1.msra.mxu0 0.0
    %76 = vmatprep.subr.mxu0 0.0
    %77 = vmatpush1.msra.mxu0 %v22
    %78 = vmatprep.subr.mxu0 0.0
    %79 = vmatpush1.msra.mxu0 %v21
    %80 = vmatprep.subr.mxu0 0.0
    %81 = vmatpush2.msra.mxu0 0.0
    %82 = vmatprep.subr.mxu0 0.0
    %83 = vmatpush2.msra.mxu0 0.0
    %84 = vmatprep.subr.mxu0 0.0
    %85 = vmatpush2.msra.mxu0 0.0
    %86 = vmatprep.subr.mxu0 0.0
    %87 = vmatpush2.msra.mxu0 0.0
    %88 = vmatprep.subr.mxu0 0.0
    %89 = vmatpush2.msra.mxu0 0.0
    %90 = vmatprep.subr.mxu0 0.0
    %91 = vmatpush2.msra.mxu0 0.0
    %92 = vmatprep.subr.mxu0 0.0
    %93 = vmatpush2.msra.mxu0 0.0
    %94 = vmatprep.subr.mxu0 0.0
    %95 = vmatpush2.msra.mxu0 0.0
    %96 = vmatprep.subr.mxu0 0.0
    %97 = vmatpush2.msra.mxu0 0.0
    %98 = vmatprep.subr.mxu0 0.0
    %99 = vmatpush2.msra.mxu0 0.0
    %100 = vmatprep.subr.mxu0 0.0
    %101 = vmatpush2.msra.mxu0 0.0
    %102 = vmatprep.subr.mxu0 0.0
    %103 = vmatpush2.msra.mxu0 0.0
    %104 = vmatprep.subr.mxu0 0.0
    %105 = vmatpush2.msra.mxu0 0.0
    %106 = vmatprep.subr.mxu0 0.0
    %107 = vmatpush2.msra.mxu0 0.0
    %108 = vmatprep.subr.mxu0 0.0
    %109 = vmatpush2.msra.mxu0 0.0
    %110 = vmatprep.subr.mxu0 0.0
    %111 = vmatpush2.msra.mxu0 0.0
    %112 = vmatprep.mubr.f32.mxu0 0.0
    %113 = vmatmul.mubr.f32.gmra.mxu0 %v43
    %v114 = vpop.f32.mrf.mxu0
    %v115 = vadd.f32 %v39, %v114
    %v116 = vpop.f32.mrf.mxu0
    %117 = vmatprep.mubr.f32.mxu0 0.0
    %118 = vmatmul.mubr.f32.gmra.mxu0 %v46
    %v119 = vpop.f32.mrf.mxu0
    %v120 = vadd.f32 %v39, %v119
    %v121 = vpop.f32.mrf.mxu0
    %122 = vdwg.mxu0
    %v123 = vmax.f32 %v115, 0.0
    %v124 = vmax.f32 %v120, 0.0
    %125 = vrot.lane.b32.xlu0 %v39, 112
    %v126 = vpop.permute.xlu0 %125
    %v129 = vsel %vm41, %v123, 0
    %v132 = vsel %vm41, %v124, 0
    %134 = vmatprep.subr.mxu0 0.0
    %135 = vmatpush1.msra.mxu0 0.0
    %136 = vmatprep.subr.mxu0 0.0
    %137 = vmatpush1.msra.mxu0 0.0
    %138 = vmatprep.subr.mxu0 0.0
    %139 = vmatpush1.msra.mxu0 0.0
    %140 = vmatprep.subr.mxu0 0.0
    %141 = vmatpush1.msra.mxu0 0.0
    %142 = vmatprep.subr.mxu0 0.0
    %143 = vmatpush1.msra.mxu0 0.0
    %144 = vmatprep.subr.mxu0 0.0
    %145 = vmatpush1.msra.mxu0 0.0
    %146 = vmatprep.subr.mxu0 0.0
    %147 = vmatpush1.msra.mxu0 0.0
    %148 = vmatprep.subr.mxu0 0.0
    %149 = vmatpush1.msra.mxu0 0.0
    %150 = vmatprep.subr.mxu0 0.0
    %151 = vmatpush1.msra.mxu0 0.0
    %152 = vmatprep.subr.mxu0 0.0
    %153 = vmatpush1.msra.mxu0 0.0
    %154 = vmatprep.subr.mxu0 0.0
    %155 = vmatpush1.msra.mxu0 0.0
    %156 = vmatprep.subr.mxu0 0.0
    %157 = vmatpush1.msra.mxu0 0.0
    %158 = vmatprep.subr.mxu0 0.0
    %159 = vmatpush1.msra.mxu0 0.0
    %160 = vmatprep.subr.mxu0 0.0
    %161 = vmatpush1.msra.mxu0 0.0
    %162 = vmatprep.subr.mxu0 0.0
    %163 = vmatpush1.msra.mxu0 %v24
    %164 = vmatprep.subr.mxu0 0.0
    %165 = vmatpush1.msra.mxu0 %v23
    %166 = vmatprep.subr.mxu0 0.0
    %167 = vmatpush2.msra.mxu0 0.0
    %168 = vmatprep.subr.mxu0 0.0
    %169 = vmatpush2.msra.mxu0 0.0
    %170 = vmatprep.subr.mxu0 0.0
    %171 = vmatpush2.msra.mxu0 0.0
    %172 = vmatprep.subr.mxu0 0.0
    %173 = vmatpush2.msra.mxu0 0.0
    %174 = vmatprep.subr.mxu0 0.0
    %175 = vmatpush2.msra.mxu0 0.0
    %176 = vmatprep.subr.mxu0 0.0
    %177 = vmatpush2.msra.mxu0 0.0
    %178 = vmatprep.subr.mxu0 0.0
    %179 = vmatpush2.msra.mxu0 0.0
    %180 = vmatprep.subr.mxu0 0.0
    %181 = vmatpush2.msra.mxu0 0.0
    %182 = vmatprep.subr.mxu0 0.0
    %183 = vmatpush2.msra.mxu0 0.0
    %184 = vmatprep.subr.mxu0 0.0
    %185 = vmatpush2.msra.mxu0 0.0
    %186 = vmatprep.subr.mxu0 0.0
    %187 = vmatpush2.msra.mxu0 0.0
    %188 = vmatprep.subr.mxu0 0.0
    %189 = vmatpush2.msra.mxu0 0.0
    %190 = vmatprep.subr.mxu0 0.0
    %191 = vmatpush2.msra.mxu0 0.0
    %192 = vmatprep.subr.mxu0 0.0
    %193 = vmatpush2.msra.mxu0 0.0
    %194 = vmatprep.subr.mxu0 0.0
    %195 = vmatpush2.msra.mxu0 0.0
    %196 = vmatprep.subr.mxu0 0.0
    %197 = vmatpush2.msra.mxu0 0.0
    %198 = vmatprep.mubr.f32.mxu0 0.0
    %199 = vmatmul.mubr.f32.gmra.mxu0 %v129
    %v200 = vpop.f32.mrf.mxu0
    %v201 = vadd.f32 %v126, %v200
    %v202 = vpop.f32.mrf.mxu0
    %203 = vmatprep.mubr.f32.mxu0 0.0
    %204 = vmatmul.mubr.f32.gmra.mxu0 %v132
    %v205 = vpop.f32.mrf.mxu0
    %v206 = vadd.f32 %v126, %v205
    %v207 = vpop.f32.mrf.mxu0
    %208 = vdwg.mxu0
    %v209 = vmax.f32 %v201, 0.0
    %v210 = vmax.f32 %v206, 0.0
    %v212 = vrot.slane %v209, 2
    %213 = vrot.lane.b32.xlu0 %v212, 16
    %v214 = vpop.permute.xlu0 %213
    %v216 = vrot.slane %v209, 4
    %217 = vrot.lane.b32.xlu0 %v216, 32
    %v218 = vpop.permute.xlu0 %217
    %v220 = vrot.slane %v209, 6
    %221 = vrot.lane.b32.xlu0 %v220, 48
    %v222 = vpop.permute.xlu0 %221
    %225 = vrot.lane.b32.xlu0 %v210, 64
    %v226 = vpop.permute.xlu0 %225
    %v228 = vrot.slane %v210, 2
    %229 = vrot.lane.b32.xlu0 %v228, 80
    %v230 = vpop.permute.xlu0 %229
    %v232 = vrot.slane %v210, 4
    %233 = vrot.lane.b32.xlu0 %v232, 96
    %v234 = vpop.permute.xlu0 %233
    %v236 = vrot.slane %v210, 6
    %237 = vrot.lane.b32.xlu0 %v236, 112
    %v238 = vpop.permute.xlu0 %237
    %v240 = vsel %vm41, %v209, %v214
    %vm241 = vcmask 261120
    %v242 = vsel %vm241, %v240, %v218
    %vm243 = vcmask 392192
    %v244 = vsel %vm243, %v242, %v222
    %vm245 = vcmask 523264
    %v246 = vsel %vm245, %v244, %v226
    %vm247 = vcmask 654336
    %v248 = vsel %vm247, %v246, %v230
    %vm249 = vcmask 785408
    %v250 = vsel %vm249, %v248, %v234
    %vm251 = vcmask 916480
    %v252 = vsel %vm251, %v250, %v238
    %253 = vst [vmem:[%s4] sm:$0x3] %v252
    %v255 = vlaneseq
    %v256 = vshrl.u32 %v255, 7
    %v257 = vsub.s32 0, %v256
    %v258 = vrot.slane %v32, %v257
    %v259 = vlaneseq
    %v260 = vshrl.u32 %v259, 7
    %v261 = vsub.s32 1, %v260
    %v262 = vrot.slane %v32, %v261
    %263 = vrot.lane.b32.xlu0 %v258, 96
    %v264 = vpop.permute.xlu0 %263
    %265 = vrot.lane.b32.xlu0 %v262, 96
    %v266 = vpop.permute.xlu0 %265
    %v267 = vsel %vm249, %v264, %v266
    %v269 = vsel %vm41, %v209, 0
    %v271 = vsel %vm41, %v210, 0
    %273 = vmatprep.subr.mxu0 0.0
    %274 = vmatpush1.msra.mxu0 0.0
    %275 = vmatprep.subr.mxu0 0.0
    %276 = vmatpush1.msra.mxu0 0.0
    %277 = vmatprep.subr.mxu0 0.0
    %278 = vmatpush1.msra.mxu0 0.0
    %279 = vmatprep.subr.mxu0 0.0
    %280 = vmatpush1.msra.mxu0 0.0
    %281 = vmatprep.subr.mxu0 0.0
    %282 = vmatpush1.msra.mxu0 0.0
    %283 = vmatprep.subr.mxu0 0.0
    %284 = vmatpush1.msra.mxu0 0.0
    %285 = vmatprep.subr.mxu0 0.0
    %286 = vmatpush1.msra.mxu0 0.0
    %287 = vmatprep.subr.mxu0 0.0
    %288 = vmatpush1.msra.mxu0 0.0
    %289 = vmatprep.subr.mxu0 0.0
    %290 = vmatpush1.msra.mxu0 0.0
    %291 = vmatprep.subr.mxu0 0.0
    %292 = vmatpush1.msra.mxu0 0.0
    %293 = vmatprep.subr.mxu0 0.0
    %294 = vmatpush1.msra.mxu0 0.0
    %295 = vmatprep.subr.mxu0 0.0
    %296 = vmatpush1.msra.mxu0 0.0
    %297 = vmatprep.subr.mxu0 0.0
    %298 = vmatpush1.msra.mxu0 0.0
    %299 = vmatprep.subr.mxu0 0.0
    %300 = vmatpush1.msra.mxu0 0.0
    %301 = vmatprep.subr.mxu0 0.0
    %302 = vmatpush1.msra.mxu0 %v26
    %303 = vmatprep.subr.mxu0 0.0
    %304 = vmatpush1.msra.mxu0 %v25
    %305 = vmatprep.subr.mxu0 0.0
    %306 = vmatpush2.msra.mxu0 0.0
    %307 = vmatprep.subr.mxu0 0.0
    %308 = vmatpush2.msra.mxu0 0.0
    %309 = vmatprep.subr.mxu0 0.0
    %310 = vmatpush2.msra.mxu0 0.0
    %311 = vmatprep.subr.mxu0 0.0
    %312 = vmatpush2.msra.mxu0 0.0
    %313 = vmatprep.subr.mxu0 0.0
    %314 = vmatpush2.msra.mxu0 0.0
    %315 = vmatprep.subr.mxu0 0.0
    %316 = vmatpush2.msra.mxu0 0.0
    %317 = vmatprep.subr.mxu0 0.0
    %318 = vmatpush2.msra.mxu0 0.0
    %319 = vmatprep.subr.mxu0 0.0
    %320 = vmatpush2.msra.mxu0 0.0
    %321 = vmatprep.subr.mxu0 0.0
    %322 = vmatpush2.msra.mxu0 0.0
    %323 = vmatprep.subr.mxu0 0.0
    %324 = vmatpush2.msra.mxu0 0.0
    %325 = vmatprep.subr.mxu0 0.0
    %326 = vmatpush2.msra.mxu0 0.0
    %327 = vmatprep.subr.mxu0 0.0
    %328 = vmatpush2.msra.mxu0 0.0
    %329 = vmatprep.subr.mxu0 0.0
    %330 = vmatpush2.msra.mxu0 0.0
    %331 = vmatprep.subr.mxu0 0.0
    %332 = vmatpush2.msra.mxu0 0.0
    %333 = vmatprep.subr.mxu0 0.0
    %334 = vmatpush2.msra.mxu0 0.0
    %335 = vmatprep.subr.mxu0 0.0
    %336 = vmatpush2.msra.mxu0 0.0
    %337 = vmatprep.mubr.f32.mxu0 0.0
    %338 = vmatmul.mubr.f32.gmra.mxu0 %v269
    %v339 = vpop.f32.mrf.mxu0
    %v340 = vadd.f32 %v267, %v339
    %v341 = vpop.f32.mrf.mxu0
    %342 = vmatprep.mubr.f32.mxu0 0.0
    %343 = vmatmul.mubr.f32.gmra.mxu0 %v271
    %v344 = vpop.f32.mrf.mxu0
    %v345 = vadd.f32 %v267, %v344
    %v346 = vpop.f32.mrf.mxu0
    %347 = vdwg.mxu0
    %v349 = vsel %vm241, 0.0, 0
    %351 = vmatprep.subr.mxu0 0.0
    %352 = vmatpush1.msra.mxu0 0.0
    %353 = vmatprep.subr.mxu0 0.0
    %354 = vmatpush1.msra.mxu0 0.0
    %355 = vmatprep.subr.mxu0 0.0
    %356 = vmatpush1.msra.mxu0 0.0
    %357 = vmatprep.subr.mxu0 0.0
    %358 = vmatpush1.msra.mxu0 0.0
    %359 = vmatprep.subr.mxu0 0.0
    %360 = vmatpush1.msra.mxu0 0.0
    %361 = vmatprep.subr.mxu0 0.0
    %362 = vmatpush1.msra.mxu0 0.0
    %363 = vmatprep.subr.mxu0 0.0
    %364 = vmatpush1.msra.mxu0 0.0
    %365 = vmatprep.subr.mxu0 0.0
    %366 = vmatpush1.msra.mxu0 0.0
    %367 = vmatprep.subr.mxu0 0.0
    %368 = vmatpush1.msra.mxu0 0.0
    %369 = vmatprep.subr.mxu0 0.0
    %370 = vmatpush1.msra.mxu0 0.0
    %371 = vmatprep.subr.mxu0 0.0
    %372 = vmatpush1.msra.mxu0 0.0
    %373 = vmatprep.subr.mxu0 0.0
    %374 = vmatpush1.msra.mxu0 0.0
    %375 = vmatprep.subr.mxu0 0.0
    %376 = vmatpush1.msra.mxu0 %v30
    %377 = vmatprep.subr.mxu0 0.0
    %378 = vmatpush1.msra.mxu0 %v29
    %379 = vmatprep.subr.mxu0 0.0
    %380 = vmatpush1.msra.mxu0 %v28
    %381 = vmatprep.subr.mxu0 0.0
    %382 = vmatpush1.msra.mxu0 %v27
    %383 = vmatprep.subr.mxu0 0.0
    %384 = vmatpush2.msra.mxu0 0.0
    %385 = vmatprep.subr.mxu0 0.0
    %386 = vmatpush2.msra.mxu0 0.0
    %387 = vmatprep.subr.mxu0 0.0
    %388 = vmatpush2.msra.mxu0 0.0
    %389 = vmatprep.subr.mxu0 0.0
    %390 = vmatpush2.msra.mxu0 0.0
    %391 = vmatprep.subr.mxu0 0.0
    %392 = vmatpush2.msra.mxu0 0.0
    %393 = vmatprep.subr.mxu0 0.0
    %394 = vmatpush2.msra.mxu0 0.0
    %395 = vmatprep.subr.mxu0 0.0
    %396 = vmatpush2.msra.mxu0 0.0
    %397 = vmatprep.subr.mxu0 0.0
    %398 = vmatpush2.msra.mxu0 0.0
    %399 = vmatprep.subr.mxu0 0.0
    %400 = vmatpush2.msra.mxu0 0.0
    %401 = vmatprep.subr.mxu0 0.0
    %402 = vmatpush2.msra.mxu0 0.0
    %403 = vmatprep.subr.mxu0 0.0
    %404 = vmatpush2.msra.mxu0 0.0
    %405 = vmatprep.subr.mxu0 0.0
    %406 = vmatpush2.msra.mxu0 0.0
    %407 = vmatprep.subr.mxu0 0.0
    %408 = vmatpush2.msra.mxu0 0.0
    %409 = vmatprep.subr.mxu0 0.0
    %410 = vmatpush2.msra.mxu0 0.0
    %411 = vmatprep.subr.mxu0 0.0
    %412 = vmatpush2.msra.mxu0 0.0
    %413 = vmatprep.subr.mxu0 0.0
    %414 = vmatpush2.msra.mxu0 0.0
    %415 = vmatprep.mubr.f32.mxu0 0.0
    %416 = vmatmul.mubr.f32.gmra.mxu0 %v349
    %v417 = vpop.f32.mrf.mxu0
    %v418 = vadd.f32 0.0, %v417
    %v419 = vpop.f32.mrf.mxu0
    %420 = vdwg.mxu0
    %v421 = vadd.f32 %v340, %v418
    %v422 = vxor.u32 %v421, 2147483648
    %v423 = vmul.f32 %v422, 1.442695
    %v424 = vpow.pop %v423
    %v425 = vadd.f32 %v424, 1.0
    %v426 = vrcp.pop %v425
    %v427 = vmul.f32 1.0, %v426
    %v428 = vtanh.pop %v421
    %v429 = vmul.f32 %v427, 0.0
    %431 = vrot.lane.b32.xlu0 %v428, 64
    %v432 = vpop.permute.xlu0 %431
    %v434 = vmul.f32 %v427, %v432
    %436 = vrot.lane.b32.xlu0 %v434, 32
    %v437 = vpop.permute.xlu0 %436
    %v439 = vadd.f32 %v429, %v437
    %v440 = vtanh.pop %v439
    %442 = vrot.lane.b32.xlu0 %v440, 64
    %v443 = vpop.permute.xlu0 %442
    %v445 = vmul.f32 %v427, %v443
    %447 = vrot.lane.b32.xlu0 %v445, 32
    %v448 = vpop.permute.xlu0 %447
    %v449 = vsel %vm241, %v448, 0
    %451 = vmatprep.subr.mxu0 0.0
    %452 = vmatpush1.msra.mxu0 0.0
    %453 = vmatprep.subr.mxu0 0.0
    %454 = vmatpush1.msra.mxu0 0.0
    %455 = vmatprep.subr.mxu0 0.0
    %456 = vmatpush1.msra.mxu0 0.0
    %457 = vmatprep.subr.mxu0 0.0
    %458 = vmatpush1.msra.mxu0 0.0
    %459 = vmatprep.subr.mxu0 0.0
    %460 = vmatpush1.msra.mxu0 0.0
    %461 = vmatprep.subr.mxu0 0.0
    %462 = vmatpush1.msra.mxu0 0.0
    %463 = vmatprep.subr.mxu0 0.0
    %464 = vmatpush1.msra.mxu0 0.0
    %465 = vmatprep.subr.mxu0 0.0
    %466 = vmatpush1.msra.mxu0 0.0
    %467 = vmatprep.subr.mxu0 0.0
    %468 = vmatpush1.msra.mxu0 0.0
    %469 = vmatprep.subr.mxu0 0.0
    %470 = vmatpush1.msra.mxu0 0.0
    %471 = vmatprep.subr.mxu0 0.0
    %472 = vmatpush1.msra.mxu0 0.0
    %473 = vmatprep.subr.mxu0 0.0
    %474 = vmatpush1.msra.mxu0 0.0
    %475 = vmatprep.subr.mxu0 0.0
    %476 = vmatpush1.msra.mxu0 %v30
    %477 = vmatprep.subr.mxu0 0.0
    %478 = vmatpush1.msra.mxu0 %v29
    %479 = vmatprep.subr.mxu0 0.0
    %480 = vmatpush1.msra.mxu0 %v28
    %481 = vmatprep.subr.mxu0 0.0
    %482 = vmatpush1.msra.mxu0 %v27
    %483 = vmatprep.subr.mxu0 0.0
    %484 = vmatpush2.msra.mxu0 0.0
    %485 = vmatprep.subr.mxu0 0.0
    %486 = vmatpush2.msra.mxu0 0.0
    %487 = vmatprep.subr.mxu0 0.0
    %488 = vmatpush2.msra.mxu0 0.0
    %489 = vmatprep.subr.mxu0 0.0
    %490 = vmatpush2.msra.mxu0 0.0
    %491 = vmatprep.subr.mxu0 0.0
    %492 = vmatpush2.msra.mxu0 0.0
    %493 = vmatprep.subr.mxu0 0.0
    %494 = vmatpush2.msra.mxu0 0.0
    %495 = vmatprep.subr.mxu0 0.0
    %496 = vmatpush2.msra.mxu0 0.0
    %497 = vmatprep.subr.mxu0 0.0
    %498 = vmatpush2.msra.mxu0 0.0
    %499 = vmatprep.subr.mxu0 0.0
    %500 = vmatpush2.msra.mxu0 0.0
    %501 = vmatprep.subr.mxu0 0.0
    %502 = vmatpush2.msra.mxu0 0.0
    %503 = vmatprep.subr.mxu0 0.0
    %504 = vmatpush2.msra.mxu0 0.0
    %505 = vmatprep.subr.mxu0 0.0
    %506 = vmatpush2.msra.mxu0 0.0
    %507 = vmatprep.subr.mxu0 0.0
    %508 = vmatpush2.msra.mxu0 0.0
    %509 = vmatprep.subr.mxu0 0.0
    %510 = vmatpush2.msra.mxu0 0.0
    %511 = vmatprep.subr.mxu0 0.0
    %512 = vmatpush2.msra.mxu0 0.0
    %513 = vmatprep.subr.mxu0 0.0
    %514 = vmatpush2.msra.mxu0 0.0
    %515 = vmatprep.mubr.f32.mxu0 0.0
    %516 = vmatmul.mubr.f32.gmra.mxu0 %v449
    %v517 = vpop.f32.mrf.mxu0
    %v518 = vadd.f32 0.0, %v517
    %v519 = vpop.f32.mrf.mxu0
    %520 = vdwg.mxu0
    %v522 = vrot.slane %v518, 6
    %v524 = vadd.f32 %v340, %v522
    %v525 = vxor.u32 %v524, 2147483648
    %v526 = vmul.f32 %v525, 1.442695
    %v527 = vpow.pop %v526
    %v528 = vadd.f32 %v527, 1.0
    %v529 = vrcp.pop %v528
    %v530 = vmul.f32 1.0, %v529
    %v531 = vtanh.pop %v524
    %v533 = vrot.slane %v439, 6
    %v535 = vmul.f32 %v530, %v533
    %537 = vrot.lane.b32.xlu0 %v531, 64
    %v538 = vpop.permute.xlu0 %537
    %v540 = vmul.f32 %v530, %v538
    %542 = vrot.lane.b32.xlu0 %v540, 32
    %v543 = vpop.permute.xlu0 %542
    %v545 = vadd.f32 %v535, %v543
    %v546 = vtanh.pop %v545
    %548 = vrot.lane.b32.xlu0 %v546, 64
    %v549 = vpop.permute.xlu0 %548
    %v551 = vmul.f32 %v530, %v549
    %v553 = vrot.slane %v551, 2
    %554 = vrot.lane.b32.xlu0 %v553, 32
    %v555 = vpop.permute.xlu0 %554
    %v556 = vsel %vm241, %v555, 0
    %558 = vmatprep.subr.mxu0 0.0
    %559 = vmatpush1.msra.mxu0 0.0
    %560 = vmatprep.subr.mxu0 0.0
    %561 = vmatpush1.msra.mxu0 0.0
    %562 = vmatprep.subr.mxu0 0.0
    %563 = vmatpush1.msra.mxu0 0.0
    %564 = vmatprep.subr.mxu0 0.0
    %565 = vmatpush1.msra.mxu0 0.0
    %566 = vmatprep.subr.mxu0 0.0
    %567 = vmatpush1.msra.mxu0 0.0
    %568 = vmatprep.subr.mxu0 0.0
    %569 = vmatpush1.msra.mxu0 0.0
    %570 = vmatprep.subr.mxu0 0.0
    %571 = vmatpush1.msra.mxu0 0.0
    %572 = vmatprep.subr.mxu0 0.0
    %573 = vmatpush1.msra.mxu0 0.0
    %574 = vmatprep.subr.mxu0 0.0
    %575 = vmatpush1.msra.mxu0 0.0
    %576 = vmatprep.subr.mxu0 0.0
    %577 = vmatpush1.msra.mxu0 0.0
    %578 = vmatprep.subr.mxu0 0.0
    %579 = vmatpush1.msra.mxu0 0.0
    %580 = vmatprep.subr.mxu0 0.0
    %581 = vmatpush1.msra.mxu0 0.0
    %582 = vmatprep.subr.mxu0 0.0
    %583 = vmatpush1.msra.mxu0 %v30
    %584 = vmatprep.subr.mxu0 0.0
    %585 = vmatpush1.msra.mxu0 %v29
    %586 = vmatprep.subr.mxu0 0.0
    %587 = vmatpush1.msra.mxu0 %v28
    %588 = vmatprep.subr.mxu0 0.0
    %589 = vmatpush1.msra.mxu0 %v27
    %590 = vmatprep.subr.mxu0 0.0
    %591 = vmatpush2.msra.mxu0 0.0
    %592 = vmatprep.subr.mxu0 0.0
    %593 = vmatpush2.msra.mxu0 0.0
    %594 = vmatprep.subr.mxu0 0.0
    %595 = vmatpush2.msra.mxu0 0.0
    %596 = vmatprep.subr.mxu0 0.0
    %597 = vmatpush2.msra.mxu0 0.0
    %598 = vmatprep.subr.mxu0 0.0
    %599 = vmatpush2.msra.mxu0 0.0
    %600 = vmatprep.subr.mxu0 0.0
    %601 = vmatpush2.msra.mxu0 0.0
    %602 = vmatprep.subr.mxu0 0.0
    %603 = vmatpush2.msra.mxu0 0.0
    %604 = vmatprep.subr.mxu0 0.0
    %605 = vmatpush2.msra.mxu0 0.0
    %606 = vmatprep.subr.mxu0 0.0
    %607 = vmatpush2.msra.mxu0 0.0
    %608 = vmatprep.subr.mxu0 0.0
    %609 = vmatpush2.msra.mxu0 0.0
    %610 = vmatprep.subr.mxu0 0.0
    %611 = vmatpush2.msra.mxu0 0.0
    %612 = vmatprep.subr.mxu0 0.0
    %613 = vmatpush2.msra.mxu0 0.0
    %614 = vmatprep.subr.mxu0 0.0
    %615 = vmatpush2.msra.mxu0 0.0
    %616 = vmatprep.subr.mxu0 0.0
    %617 = vmatpush2.msra.mxu0 0.0
    %618 = vmatprep.subr.mxu0 0.0
    %619 = vmatpush2.msra.mxu0 0.0
    %620 = vmatprep.subr.mxu0 0.0
    %621 = vmatpush2.msra.mxu0 0.0
    %622 = vmatprep.mubr.f32.mxu0 0.0
    %623 = vmatmul.mubr.f32.gmra.mxu0 %v556
    %v624 = vpop.f32.mrf.mxu0
    %v625 = vadd.f32 0.0, %v624
    %v626 = vpop.f32.mrf.mxu0
    %627 = vdwg.mxu0
    %v629 = vrot.slane %v625, 4
    %v631 = vadd.f32 %v340, %v629
    %v632 = vxor.u32 %v631, 2147483648
    %v633 = vmul.f32 %v632, 1.442695
    %v634 = vpow.pop %v633
    %v635 = vadd.f32 %v634, 1.0
    %v636 = vrcp.pop %v635
    %v637 = vmul.f32 1.0, %v636
    %v638 = vtanh.pop %v631
    %v640 = vrot.slane %v545, 6
    %v642 = vmul.f32 %v637, %v640
    %644 = vrot.lane.b32.xlu0 %v638, 64
    %v645 = vpop.permute.xlu0 %644
    %v647 = vmul.f32 %v637, %v645
    %649 = vrot.lane.b32.xlu0 %v647, 32
    %v650 = vpop.permute.xlu0 %649
    %v652 = vadd.f32 %v642, %v650
    %v653 = vtanh.pop %v652
    %655 = vrot.lane.b32.xlu0 %v653, 64
    %v656 = vpop.permute.xlu0 %655
    %v658 = vmul.f32 %v637, %v656
    %v660 = vrot.slane %v658, 4
    %661 = vrot.lane.b32.xlu0 %v660, 32
    %v662 = vpop.permute.xlu0 %661
    %v663 = vsel %vm241, %v662, 0
    %665 = vmatprep.subr.mxu0 0.0
    %666 = vmatpush1.msra.mxu0 0.0
    %667 = vmatprep.subr.mxu0 0.0
    %668 = vmatpush1.msra.mxu0 0.0
    %669 = vmatprep.subr.mxu0 0.0
    %670 = vmatpush1.msra.mxu0 0.0
    %671 = vmatprep.subr.mxu0 0.0
    %672 = vmatpush1.msra.mxu0 0.0
    %673 = vmatprep.subr.mxu0 0.0
    %674 = vmatpush1.msra.mxu0 0.0
    %675 = vmatprep.subr.mxu0 0.0
    %676 = vmatpush1.msra.mxu0 0.0
    %677 = vmatprep.subr.mxu0 0.0
    %678 = vmatpush1.msra.mxu0 0.0
    %679 = vmatprep.subr.mxu0 0.0
    %680 = vmatpush1.msra.mxu0 0.0
    %681 = vmatprep.subr.mxu0 0.0
    %682 = vmatpush1.msra.mxu0 0.0
    %683 = vmatprep.subr.mxu0 0.0
    %684 = vmatpush1.msra.mxu0 0.0
    %685 = vmatprep.subr.mxu0 0.0
    %686 = vmatpush1.msra.mxu0 0.0
    %687 = vmatprep.subr.mxu0 0.0
    %688 = vmatpush1.msra.mxu0 0.0
    %689 = vmatprep.subr.mxu0 0.0
    %690 = vmatpush1.msra.mxu0 %v30
    %691 = vmatprep.subr.mxu0 0.0
    %692 = vmatpush1.msra.mxu0 %v29
    %693 = vmatprep.subr.mxu0 0.0
    %694 = vmatpush1.msra.mxu0 %v28
    %695 = vmatprep.subr.mxu0 0.0
    %696 = vmatpush1.msra.mxu0 %v27
    %697 = vmatprep.subr.mxu0 0.0
    %698 = vmatpush2.msra.mxu0 0.0
    %699 = vmatprep.subr.mxu0 0.0
    %700 = vmatpush2.msra.mxu0 0.0
    %701 = vmatprep.subr.mxu0 0.0
    %702 = vmatpush2.msra.mxu0 0.0
    %703 = vmatprep.subr.mxu0 0.0
    %704 = vmatpush2.msra.mxu0 0.0
    %705 = vmatprep.subr.mxu0 0.0
    %706 = vmatpush2.msra.mxu0 0.0
    %707 = vmatprep.subr.mxu0 0.0
    %708 = vmatpush2.msra.mxu0 0.0
    %709 = vmatprep.subr.mxu0 0.0
    %710 = vmatpush2.msra.mxu0 0.0
    %711 = vmatprep.subr.mxu0 0.0
    %712 = vmatpush2.msra.mxu0 0.0
    %713 = vmatprep.subr.mxu0 0.0
    %714 = vmatpush2.msra.mxu0 0.0
    %715 = vmatprep.subr.mxu0 0.0
    %716 = vmatpush2.msra.mxu0 0.0
    %717 = vmatprep.subr.mxu0 0.0
    %718 = vmatpush2.msra.mxu0 0.0
    %719 = vmatprep.subr.mxu0 0.0
    %720 = vmatpush2.msra.mxu0 0.0
    %721 = vmatprep.subr.mxu0 0.0
    %722 = vmatpush2.msra.mxu0 0.0
    %723 = vmatprep.subr.mxu0 0.0
    %724 = vmatpush2.msra.mxu0 0.0
    %725 = vmatprep.subr.mxu0 0.0
    %726 = vmatpush2.msra.mxu0 0.0
    %727 = vmatprep.subr.mxu0 0.0
    %728 = vmatpush2.msra.mxu0 0.0
    %729 = vmatprep.mubr.f32.mxu0 0.0
    %730 = vmatmul.mubr.f32.gmra.mxu0 %v663
    %v731 = vpop.f32.mrf.mxu0
    %v732 = vadd.f32 0.0, %v731
    %v733 = vpop.f32.mrf.mxu0
    %734 = vdwg.mxu0
    %v736 = vrot.slane %v732, 2
    %v738 = vadd.f32 %v340, %v736
    %v739 = vxor.u32 %v738, 2147483648
    %v740 = vmul.f32 %v739, 1.442695
    %v741 = vpow.pop %v740
    %v742 = vadd.f32 %v741, 1.0
    %v743 = vrcp.pop %v742
    %v744 = vmul.f32 1.0, %v743
    %v745 = vtanh.pop %v738
    %v747 = vrot.slane %v652, 6
    %v749 = vmul.f32 %v744, %v747
    %751 = vrot.lane.b32.xlu0 %v745, 64
    %v752 = vpop.permute.xlu0 %751
    %v754 = vmul.f32 %v744, %v752
    %756 = vrot.lane.b32.xlu0 %v754, 32
    %v757 = vpop.permute.xlu0 %756
    %v759 = vadd.f32 %v749, %v757
    %v760 = vtanh.pop %v759
    %762 = vrot.lane.b32.xlu0 %v760, 64
    %v763 = vpop.permute.xlu0 %762
    %v765 = vmul.f32 %v744, %v763
    %v767 = vrot.slane %v765, 6
    %768 = vrot.lane.b32.xlu0 %v767, 32
    %v769 = vpop.permute.xlu0 %768
    %v770 = vsel %vm241, %v769, 0
    %772 = vmatprep.subr.mxu0 0.0
    %773 = vmatpush1.msra.mxu0 0.0
    %774 = vmatprep.subr.mxu0 0.0
    %775 = vmatpush1.msra.mxu0 0.0
    %776 = vmatprep.subr.mxu0 0.0
    %777 = vmatpush1.msra.mxu0 0.0
    %778 = vmatprep.subr.mxu0 0.0
    %779 = vmatpush1.msra.mxu0 0.0
    %780 = vmatprep.subr.mxu0 0.0
    %781 = vmatpush1.msra.mxu0 0.0
    %782 = vmatprep.subr.mxu0 0.0
    %783 = vmatpush1.msra.mxu0 0.0
    %784 = vmatprep.subr.mxu0 0.0
    %785 = vmatpush1.msra.mxu0 0.0
    %786 = vmatprep.subr.mxu0 0.0
    %787 = vmatpush1.msra.mxu0 0.0
    %788 = vmatprep.subr.mxu0 0.0
    %789 = vmatpush1.msra.mxu0 0.0
    %790 = vmatprep.subr.mxu0 0.0
    %791 = vmatpush1.msra.mxu0 0.0
    %792 = vmatprep.subr.mxu0 0.0
    %793 = vmatpush1.msra.mxu0 0.0
    %794 = vmatprep.subr.mxu0 0.0
    %795 = vmatpush1.msra.mxu0 0.0
    %796 = vmatprep.subr.mxu0 0.0
    %797 = vmatpush1.msra.mxu0 %v30
    %798 = vmatprep.subr.mxu0 0.0
    %799 = vmatpush1.msra.mxu0 %v29
    %800 = vmatprep.subr.mxu0 0.0
    %801 = vmatpush1.msra.mxu0 %v28
    %802 = vmatprep.subr.mxu0 0.0
    %803 = vmatpush1.msra.mxu0 %v27
    %804 = vmatprep.subr.mxu0 0.0
    %805 = vmatpush2.msra.mxu0 0.0
    %806 = vmatprep.subr.mxu0 0.0
    %807 = vmatpush2.msra.mxu0 0.0
    %808 = vmatprep.subr.mxu0 0.0
    %809 = vmatpush2.msra.mxu0 0.0
    %810 = vmatprep.subr.mxu0 0.0
    %811 = vmatpush2.msra.mxu0 0.0
    %812 = vmatprep.subr.mxu0 0.0
    %813 = vmatpush2.msra.mxu0 0.0
    %814 = vmatprep.subr.mxu0 0.0
    %815 = vmatpush2.msra.mxu0 0.0
    %816 = vmatprep.subr.mxu0 0.0
    %817 = vmatpush2.msra.mxu0 0.0
    %818 = vmatprep.subr.mxu0 0.0
    %819 = vmatpush2.msra.mxu0 0.0
    %820 = vmatprep.subr.mxu0 0.0
    %821 = vmatpush2.msra.mxu0 0.0
    %822 = vmatprep.subr.mxu0 0.0
    %823 = vmatpush2.msra.mxu0 0.0
    %824 = vmatprep.subr.mxu0 0.0
    %825 = vmatpush2.msra.mxu0 0.0
    %826 = vmatprep.subr.mxu0 0.0
    %827 = vmatpush2.msra.mxu0 0.0
    %828 = vmatprep.subr.mxu0 0.0
    %829 = vmatpush2.msra.mxu0 0.0
    %830 = vmatprep.subr.mxu0 0.0
    %831 = vmatpush2.msra.mxu0 0.0
    %832 = vmatprep.subr.mxu0 0.0
    %833 = vmatpush2.msra.mxu0 0.0
    %834 = vmatprep.subr.mxu0 0.0
    %835 = vmatpush2.msra.mxu0 0.0
    %836 = vmatprep.mubr.f32.mxu0 0.0
    %837 = vmatmul.mubr.f32.gmra.mxu0 %v770
    %v838 = vpop.f32.mrf.mxu0
    %v839 = vadd.f32 0.0, %v838
    %v840 = vpop.f32.mrf.mxu0
    %841 = vdwg.mxu0
    %v842 = vadd.f32 %v345, %v839
    %v843 = vxor.u32 %v842, 2147483648
    %v844 = vmul.f32 %v843, 1.442695
    %v845 = vpow.pop %v844
    %v846 = vadd.f32 %v845, 1.0
    %v847 = vrcp.pop %v846
    %v848 = vmul.f32 1.0, %v847
    %v849 = vtanh.pop %v842
    %v851 = vrot.slane %v759, 6
    %v853 = vmul.f32 %v848, %v851
    %855 = vrot.lane.b32.xlu0 %v849, 64
    %v856 = vpop.permute.xlu0 %855
    %v858 = vmul.f32 %v848, %v856
    %860 = vrot.lane.b32.xlu0 %v858, 32
    %v861 = vpop.permute.xlu0 %860
    %v863 = vadd.f32 %v853, %v861
    %v864 = vtanh.pop %v863
    %866 = vrot.lane.b32.xlu0 %v864, 64
    %v867 = vpop.permute.xlu0 %866
    %v869 = vmul.f32 %v848, %v867
    %871 = vrot.lane.b32.xlu0 %v869, 32
    %v872 = vpop.permute.xlu0 %871
    %v873 = vsel %vm241, %v872, 0
    %875 = vmatprep.subr.mxu0 0.0
    %876 = vmatpush1.msra.mxu0 0.0
    %877 = vmatprep.subr.mxu0 0.0
    %878 = vmatpush1.msra.mxu0 0.0
    %879 = vmatprep.subr.mxu0 0.0
    %880 = vmatpush1.msra.mxu0 0.0
    %881 = vmatprep.subr.mxu0 0.0
    %882 = vmatpush1.msra.mxu0 0.0
    %883 = vmatprep.subr.mxu0 0.0
    %884 = vmatpush1.msra.mxu0 0.0
    %885 = vmatprep.subr.mxu0 0.0
    %886 = vmatpush1.msra.mxu0 0.0
    %887 = vmatprep.subr.mxu0 0.0
    %888 = vmatpush1.msra.mxu0 0.0
    %889 = vmatprep.subr.mxu0 0.0
    %890 = vmatpush1.msra.mxu0 0.0
    %891 = vmatprep.subr.mxu0 0.0
    %892 = vmatpush1.msra.mxu0 0.0
    %893 = vmatprep.subr.mxu0 0.0
    %894 = vmatpush1.msra.mxu0 0.0
    %895 = vmatprep.subr.mxu0 0.0
    %896 = vmatpush1.msra.mxu0 0.0
    %897 = vmatprep.subr.mxu0 0.0
    %898 = vmatpush1.msra.mxu0 0.0
    %899 = vmatprep.subr.mxu0 0.0
    %900 = vmatpush1.msra.mxu0 %v30
    %901 = vmatprep.subr.mxu0 0.0
    %902 = vmatpush1.msra.mxu0 %v29
    %903 = vmatprep.subr.mxu0 0.0
    %904 = vmatpush1.msra.mxu0 %v28
    %905 = vmatprep.subr.mxu0 0.0
    %906 = vmatpush1.msra.mxu0 %v27
    %907 = vmatprep.subr.mxu0 0.0
    %908 = vmatpush2.msra.mxu0 0.0
    %909 = vmatprep.subr.mxu0 0.0
    %910 = vmatpush2.msra.mxu0 0.0
    %911 = vmatprep.subr.mxu0 0.0
    %912 = vmatpush2.msra.mxu0 0.0
    %913 = vmatprep.subr.mxu0 0.0
    %914 = vmatpush2.msra.mxu0 0.0
    %915 = vmatprep.subr.mxu0 0.0
    %916 = vmatpush2.msra.mxu0 0.0
    %917 = vmatprep.subr.mxu0 0.0
    %918 = vmatpush2.msra.mxu0 0.0
    %919 = vmatprep.subr.mxu0 0.0
    %920 = vmatpush2.msra.mxu0 0.0
    %921 = vmatprep.subr.mxu0 0.0
    %922 = vmatpush2.msra.mxu0 0.0
    %923 = vmatprep.subr.mxu0 0.0
    %924 = vmatpush2.msra.mxu0 0.0
    %925 = vmatprep.subr.mxu0 0.0
    %926 = vmatpush2.msra.mxu0 0.0
    %927 = vmatprep.subr.mxu0 0.0
    %928 = vmatpush2.msra.mxu0 0.0
    %929 = vmatprep.subr.mxu0 0.0
    %930 = vmatpush2.msra.mxu0 0.0
    %931 = vmatprep.subr.mxu0 0.0
    %932 = vmatpush2.msra.mxu0 0.0
    %933 = vmatprep.subr.mxu0 0.0
    %934 = vmatpush2.msra.mxu0 0.0
    %935 = vmatprep.subr.mxu0 0.0
    %936 = vmatpush2.msra.mxu0 0.0
    %937 = vmatprep.subr.mxu0 0.0
    %938 = vmatpush2.msra.mxu0 0.0
    %939 = vmatprep.mubr.f32.mxu0 0.0
    %940 = vmatmul.mubr.f32.gmra.mxu0 %v873
    %v941 = vpop.f32.mrf.mxu0
    %v942 = vadd.f32 0.0, %v941
    %v943 = vpop.f32.mrf.mxu0
    %944 = vdwg.mxu0
    %v946 = vrot.slane %v942, 6
    %v948 = vadd.f32 %v345, %v946
    %v949 = vxor.u32 %v948, 2147483648
    %v950 = vmul.f32 %v949, 1.442695
    %v951 = vpow.pop %v950
    %v952 = vadd.f32 %v951, 1.0
    %v953 = vrcp.pop %v952
    %v954 = vmul.f32 1.0, %v953
    %v955 = vtanh.pop %v948
    %v957 = vrot.slane %v863, 6
    %v959 = vmul.f32 %v954, %v957
    %961 = vrot.lane.b32.xlu0 %v955, 64
    %v962 = vpop.permute.xlu0 %961
    %v964 = vmul.f32 %v954, %v962
    %966 = vrot.lane.b32.xlu0 %v964, 32
    %v967 = vpop.permute.xlu0 %966
    %v969 = vadd.f32 %v959, %v967
    %v970 = vtanh.pop %v969
    %972 = vrot.lane.b32.xlu0 %v970, 64
    %v973 = vpop.permute.xlu0 %972
    %v975 = vmul.f32 %v954, %v973
    %v977 = vrot.slane %v975, 2
    %978 = vrot.lane.b32.xlu0 %v977, 32
    %v979 = vpop.permute.xlu0 %978
    %v980 = vsel %vm241, %v979, 0
    %982 = vmatprep.subr.mxu0 0.0
    %983 = vmatpush1.msra.mxu0 0.0
    %984 = vmatprep.subr.mxu0 0.0
    %985 = vmatpush1.msra.mxu0 0.0
    %986 = vmatprep.subr.mxu0 0.0
    %987 = vmatpush1.msra.mxu0 0.0
    %988 = vmatprep.subr.mxu0 0.0
    %989 = vmatpush1.msra.mxu0 0.0
    %990 = vmatprep.subr.mxu0 0.0
    %991 = vmatpush1.msra.mxu0 0.0
    %992 = vmatprep.subr.mxu0 0.0
    %993 = vmatpush1.msra.mxu0 0.0
    %994 = vmatprep.subr.mxu0 0.0
    %995 = vmatpush1.msra.mxu0 0.0
    %996 = vmatprep.subr.mxu0 0.0
    %997 = vmatpush1.msra.mxu0 0.0
    %998 = vmatprep.subr.mxu0 0.0
    %999 = vmatpush1.msra.mxu0 0.0
    %1000 = vmatprep.subr.mxu0 0.0
    %1001 = vmatpush1.msra.mxu0 0.0
    %1002 = vmatprep.subr.mxu0 0.0
    %1003 = vmatpush1.msra.mxu0 0.0
    %1004 = vmatprep.subr.mxu0 0.0
    %1005 = vmatpush1.msra.mxu0 0.0
    %1006 = vmatprep.subr.mxu0 0.0
    %1007 = vmatpush1.msra.mxu0 %v30
    %1008 = vmatprep.subr.mxu0 0.0
    %1009 = vmatpush1.msra.mxu0 %v29
    %1010 = vmatprep.subr.mxu0 0.0
    %1011 = vmatpush1.msra.mxu0 %v28
    %1012 = vmatprep.subr.mxu0 0.0
    %1013 = vmatpush1.msra.mxu0 %v27
    %1014 = vmatprep.subr.mxu0 0.0
    %1015 = vmatpush2.msra.mxu0 0.0
    %1016 = vmatprep.subr.mxu0 0.0
    %1017 = vmatpush2.msra.mxu0 0.0
    %1018 = vmatprep.subr.mxu0 0.0
    %1019 = vmatpush2.msra.mxu0 0.0
    %1020 = vmatprep.subr.mxu0 0.0
    %1021 = vmatpush2.msra.mxu0 0.0
    %1022 = vmatprep.subr.mxu0 0.0
    %1023 = vmatpush2.msra.mxu0 0.0
    %1024 = vmatprep.subr.mxu0 0.0
    %1025 = vmatpush2.msra.mxu0 0.0
    %1026 = vmatprep.subr.mxu0 0.0
    %1027 = vmatpush2.msra.mxu0 0.0
    %1028 = vmatprep.subr.mxu0 0.0
    %1029 = vmatpush2.msra.mxu0 0.0
    %1030 = vmatprep.subr.mxu0 0.0
    %1031 = vmatpush2.msra.mxu0 0.0
    %1032 = vmatprep.subr.mxu0 0.0
    %1033 = vmatpush2.msra.mxu0 0.0
    %1034 = vmatprep.subr.mxu0 0.0
    %1035 = vmatpush2.msra.mxu0 0.0
    %1036 = vmatprep.subr.mxu0 0.0
    %1037 = vmatpush2.msra.mxu0 0.0
    %1038 = vmatprep.subr.mxu0 0.0
    %1039 = vmatpush2.msra.mxu0 0.0
    %1040 = vmatprep.subr.mxu0 0.0
    %1041 = vmatpush2.msra.mxu0 0.0
    %1042 = vmatprep.subr.mxu0 0.0
    %1043 = vmatpush2.msra.mxu0 0.0
    %1044 = vmatprep.subr.mxu0 0.0
    %1045 = vmatpush2.msra.mxu0 0.0
    %1046 = vmatprep.mubr.f32.mxu0 0.0
    %1047 = vmatmul.mubr.f32.gmra.mxu0 %v980
    %v1048 = vpop.f32.mrf.mxu0
    %v1049 = vadd.f32 0.0, %v1048
    %v1050 = vpop.f32.mrf.mxu0
    %1051 = vdwg.mxu0
    %v1053 = vrot.slane %v1049, 4
    %v1055 = vadd.f32 %v345, %v1053
    %v1056 = vxor.u32 %v1055, 2147483648
    %v1057 = vmul.f32 %v1056, 1.442695
    %v1058 = vpow.pop %v1057
    %v1059 = vadd.f32 %v1058, 1.0
    %v1060 = vrcp.pop %v1059
    %v1061 = vmul.f32 1.0, %v1060
    %v1062 = vtanh.pop %v1055
    %v1064 = vrot.slane %v969, 6
    %v1066 = vmul.f32 %v1061, %v1064
    %1068 = vrot.lane.b32.xlu0 %v1062, 64
    %v1069 = vpop.permute.xlu0 %1068
    %v1071 = vmul.f32 %v1061, %v1069
    %1073 = vrot.lane.b32.xlu0 %v1071, 32
    %v1074 = vpop.permute.xlu0 %1073
    %v1076 = vadd.f32 %v1066, %v1074
    %v1077 = vtanh.pop %v1076
    %1079 = vrot.lane.b32.xlu0 %v1077, 64
    %v1080 = vpop.permute.xlu0 %1079
    %v1082 = vmul.f32 %v1061, %v1080
    %v1084 = vrot.slane %v1082, 4
    %1085 = vrot.lane.b32.xlu0 %v1084, 32
    %v1086 = vpop.permute.xlu0 %1085
    %v1087 = vsel %vm241, %v1086, 0
    %1089 = vmatprep.subr.mxu0 0.0
    %1090 = vmatpush1.msra.mxu0 0.0
    %1091 = vmatprep.subr.mxu0 0.0
    %1092 = vmatpush1.msra.mxu0 0.0
    %1093 = vmatprep.subr.mxu0 0.0
    %1094 = vmatpush1.msra.mxu0 0.0
    %1095 = vmatprep.subr.mxu0 0.0
    %1096 = vmatpush1.msra.mxu0 0.0
    %1097 = vmatprep.subr.mxu0 0.0
    %1098 = vmatpush1.msra.mxu0 0.0
    %1099 = vmatprep.subr.mxu0 0.0
    %1100 = vmatpush1.msra.mxu0 0.0
    %1101 = vmatprep.subr.mxu0 0.0
    %1102 = vmatpush1.msra.mxu0 0.0
    %1103 = vmatprep.subr.mxu0 0.0
    %1104 = vmatpush1.msra.mxu0 0.0
    %1105 = vmatprep.subr.mxu0 0.0
    %1106 = vmatpush1.msra.mxu0 0.0
    %1107 = vmatprep.subr.mxu0 0.0
    %1108 = vmatpush1.msra.mxu0 0.0
    %1109 = vmatprep.subr.mxu0 0.0
    %1110 = vmatpush1.msra.mxu0 0.0
    %1111 = vmatprep.subr.mxu0 0.0
    %1112 = vmatpush1.msra.mxu0 0.0
    %1113 = vmatprep.subr.mxu0 0.0
    %1114 = vmatpush1.msra.mxu0 %v30
    %1115 = vmatprep.subr.mxu0 0.0
    %1116 = vmatpush1.msra.mxu0 %v29
    %1117 = vmatprep.subr.mxu0 0.0
    %1118 = vmatpush1.msra.mxu0 %v28
    %1119 = vmatprep.subr.mxu0 0.0
    %1120 = vmatpush1.msra.mxu0 %v27
    %1121 = vmatprep.subr.mxu0 0.0
    %1122 = vmatpush2.msra.mxu0 0.0
    %1123 = vmatprep.subr.mxu0 0.0
    %1124 = vmatpush2.msra.mxu0 0.0
    %1125 = vmatprep.subr.mxu0 0.0
    %1126 = vmatpush2.msra.mxu0 0.0
    %1127 = vmatprep.subr.mxu0 0.0
    %1128 = vmatpush2.msra.mxu0 0.0
    %1129 = vmatprep.subr.mxu0 0.0
    %1130 = vmatpush2.msra.mxu0 0.0
    %1131 = vmatprep.subr.mxu0 0.0
    %1132 = vmatpush2.msra.mxu0 0.0
    %1133 = vmatprep.subr.mxu0 0.0
    %1134 = vmatpush2.msra.mxu0 0.0
    %1135 = vmatprep.subr.mxu0 0.0
    %1136 = vmatpush2.msra.mxu0 0.0
    %1137 = vmatprep.subr.mxu0 0.0
    %1138 = vmatpush2.msra.mxu0 0.0
    %1139 = vmatprep.subr.mxu0 0.0
    %1140 = vmatpush2.msra.mxu0 0.0
    %1141 = vmatprep.subr.mxu0 0.0
    %1142 = vmatpush2.msra.mxu0 0.0
    %1143 = vmatprep.subr.mxu0 0.0
    %1144 = vmatpush2.msra.mxu0 0.0
    %1145 = vmatprep.subr.mxu0 0.0
    %1146 = vmatpush2.msra.mxu0 0.0
    %1147 = vmatprep.subr.mxu0 0.0
    %1148 = vmatpush2.msra.mxu0 0.0
    %1149 = vmatprep.subr.mxu0 0.0
    %1150 = vmatpush2.msra.mxu0 0.0
    %1151 = vmatprep.subr.mxu0 0.0
    %1152 = vmatpush2.msra.mxu0 0.0
    %1153 = vmatprep.mubr.f32.mxu0 0.0
    %1154 = vmatmul.mubr.f32.gmra.mxu0 %v1087
    %v1155 = vpop.f32.mrf.mxu0
    %v1156 = vadd.f32 0.0, %v1155
    %v1157 = vpop.f32.mrf.mxu0
    %1158 = vdwg.mxu0
    %v1160 = vrot.slane %v1156, 2
    %v1162 = vadd.f32 %v345, %v1160
    %v1163 = vxor.u32 %v1162, 2147483648
    %v1164 = vmul.f32 %v1163, 1.442695
    %v1165 = vpow.pop %v1164
    %v1166 = vadd.f32 %v1165, 1.0
    %v1167 = vrcp.pop %v1166
    %v1168 = vmul.f32 1.0, %v1167
    %v1169 = vtanh.pop %v1162
    %v1171 = vrot.slane %v1076, 6
    %v1173 = vmul.f32 %v1168, %v1171
    %1175 = vrot.lane.b32.xlu0 %v1169, 64
    %v1176 = vpop.permute.xlu0 %1175
    %v1178 = vmul.f32 %v1168, %v1176
    %1180 = vrot.lane.b32.xlu0 %v1178, 32
    %v1181 = vpop.permute.xlu0 %1180
    %v1183 = vadd.f32 %v1173, %v1181
    %v1184 = vtanh.pop %v1183
    %1186 = vrot.lane.b32.xlu0 %v1184, 64
    %v1187 = vpop.permute.xlu0 %1186
    %v1189 = vmul.f32 %v1168, %v1187
    %1191 = vrot.lane.b32.xlu0 %v553, 64
    %v1192 = vpop.permute.xlu0 %1191
    %1194 = vrot.lane.b32.xlu0 %v660, 96
    %v1195 = vpop.permute.xlu0 %1194
    %1199 = vrot.lane.b32.xlu0 %v977, 64
    %v1200 = vpop.permute.xlu0 %1199
    %1202 = vrot.lane.b32.xlu0 %v1084, 96
    %v1203 = vpop.permute.xlu0 %1202
    %v1206 = vrot.slane %v1189, 6
    %v1208 = vsel %vm241, %v448, %v1192
    %v1209 = vsel %vm245, %v1208, %v1195
    %v1210 = vsel %vm249, %v1209, %v767
    %v1211 = vsel %vm241, %v872, %v1200
    %v1212 = vsel %vm245, %v1211, %v1203
    %v1213 = vsel %vm249, %v1212, %v1206
    %v1216 = vcombine.low %v1210, %v1213
    %v1218 = vunpack.c.l.s4 1983009808
    %v1219 = vunpack.c.0.s8 %v1218
    %v1220 = vlaneseq
    %v1221 = vshrl.u32 %v1220, 7
    %v1222 = vsub.s32 %v1219, %v1221
    %v1223 = vrot.slane %v1216, %v1222
    %1225 = vst [vmem:[%s5] sm:$0xf] %v1223
    %1227 = vrot.lane.b32.xlu0 %v1183, 96
    %v1228 = vpop.permute.xlu0 %1227
    %vm1230 = vcmask 261126
    %1231 = vst.msk [vmem:[#allocation2 - $0x6] sm:$0xc0] %vm1230, %v1228
    // Predicated region
    $region18: #{td_vae_forward.1} parent=1 // pred_check
      _
    $region19: #{td_vae_forward.1} parent=1 // pred_check_branch
      %1233 = sbr.rel (0) target = $region21
    $region20: #{td_vae_forward.1} parent=1 // pred_region
      _
    $region21: #{td_vae_forward.1} parent=1 // pred_fallthru
      _
    // Predicated region
    $region22: #{td_vae_forward.1} parent=1 // pred_check
      _
    $region23: #{td_vae_forward.1} parent=1 // pred_check_branch
      %1235 = sbr.rel (0) target = $region25
    $region24: #{td_vae_forward.1} parent=1 // pred_region
      _
    $region25: #{td_vae_forward.1} parent=1 // pred_fallthru
      _
    // Predicated region
    $region26: #{td_vae_forward.1} parent=1 // pred_check
      _
    $region27: #{td_vae_forward.1} parent=1 // pred_check_branch
      %1237 = sbr.rel (0) target = $region29
    $region28: #{td_vae_forward.1} parent=1 // pred_region
      %s1239 = ssub.s32 32, 32
      %1240 = vsyncadd [#allocation3], %s1239
      %s1242 = sshll.u32 [#allocation2], 4
      %s1243 = int_to_ptr.vmem [resolvable:$true] %s1242
      %1245 = dma.vmem_to_hbm [thread:$0]  %s1243, 32, %s6, [#allocation3]
    $region29: #{td_vae_forward.1} parent=1 // pred_fallthru
      _
    // Predicated region
    $region30: #{td_vae_forward.1} parent=1 // pred_check
      _
    $region31: #{td_vae_forward.1} parent=1 // pred_check_branch
      %1247 = sbr.rel (0) target = $region33
    $region32: #{td_vae_forward.1} parent=1 // pred_region
      _
    $region33: #{td_vae_forward.1} parent=1 // pred_fallthru
      _
    // Predicated region
    $region34: #{td_vae_forward.1} parent=1 // pred_check
      _
    $region35: #{td_vae_forward.1} parent=1 // pred_check_branch
      %1249 = sbr.rel (0) target = $region37
    $region36: #{td_vae_forward.1} parent=1 // pred_region
      _
    $region37: #{td_vae_forward.1} parent=1 // pred_fallthru
      _
    // Predicated region
    $region38: #{td_vae_forward.1} parent=1 // pred_check
      _
    $region39: #{td_vae_forward.1} parent=1 // pred_check_branch
      %1251 = sbr.rel (0) target = $region41
    $region40: #{td_vae_forward.1} parent=1 // pred_region
      %1252 = dma.done [#allocation3], 32
    $region41: #{td_vae_forward.1} parent=1 // pred_fallthru
      _
    %1253 = vsyncpa [#allocation3], 1

</llo_original>
